<compile_context>
chip_gen: v5e
topology: v5e:2x2
jax: 0.10.0
libtpu: 0.0.40
codegen_flags: <defaults>
</compile_context>

<pallas_src>
import jax
import jax.numpy as jnp
from jax.experimental import pallas as pl
from jax.experimental.pallas import tpu as pltpu

EPS = 1e-5       # PyTorch BatchNorm1d default eps
LANE = 128
SUBLANE = 8


def _round_up(n, m):
    return ((n + m - 1) // m) * m


# ----------------------------------------------------------------------------
# Pallas kernel: whole autoencoder MLP fused
#   per layer: bf16 MXU matmul (f32 acc) -> +bias -> ReLU -> folded-BN affine
# ----------------------------------------------------------------------------
def _ae_kernel(x_ref, w_ref, aff_ref, o_ref):
    """x_ref:(tb,P) bf16 | w_ref:(L,P,P) bf16 | aff_ref:(L,8,P) f32 | o_ref:(tb,P) f32."""
    n_layers = w_ref.shape[0]
    h = x_ref[...]                              # bf16; feeds the first MXU pass directly
    for l in range(n_layers):                   # static unroll (4 layers)
        aff = aff_ref[l]                        # (8, P) f32: row0=bias row1=scale row2=shift
        z = jnp.dot(h.astype(w_ref.dtype), w_ref[l],
                    preferred_element_type=jnp.float32)
        z = jnp.maximum(z + aff[0:1, :], 0.0)   # Linear bias + ReLU
        h = z * aff[1:2, :] + aff[2:3, :]       # BatchNorm1d (eval), pre-folded
        # Dropout: identity in eval mode.
    o_ref[...] = h.astype(o_ref.dtype)


# ----------------------------------------------------------------------------
# Wrapper
# ----------------------------------------------------------------------------
def _choose_batch_tile(B, max_tile=1024, min_steps=2):
    """Sublane-friendly batch tile: aim for >= min_steps grid steps (so v7x's
    two TensorCores both get work) while capping the tile size (VMEM headroom
    on v7x). Returns (tile, padded_batch)."""
    B8 = _round_up(max(B, 1), SUBLANE)
    tb = _round_up(-(-B8 // min_steps), SUBLANE)
    tb = max(SUBLANE, min(tb, max_tile))
    return tb, _round_up(B8, tb)


def autoencoder_forward(x, params, *, tb=None, matmul_dtype=jnp.bfloat16):
    """x: (B, D) float32.

    params: list of 6-tuples (W, b, gamma, beta, mean, var) per layer with
    W: (in, out), others (1, out). BN is folded, all feature dims zero-padded
    to a common lane-aligned width P, layers stacked, weights cast to
    `matmul_dtype`, and the batch zero-padded to a tile multiple.
    """
    B, D = x.shape
    n_layers = len(params)
    feat_dims = [D] + [w.shape[1] for (w, *_r) in params]
    P = max(_round_up(d, LANE) for d in feat_dims)   # common padded feature width

    # Fold BN to (scale, shift); pad & stack parameters. Padded lanes get
    # bias = scale = shift = 0 so padded activations stay exactly 0.
    w_stack, aff_stack = [], []
    for (w, b, gamma, beta, mean, var) in params:
        fi, fo = w.shape
        scale = gamma * jax.lax.rsqrt(var + EPS)
        shift = beta - mean * scale
        w_p = jnp.zeros((P, P), jnp.float32).at[:fi, :fo].set(w)
        aff = jnp.zeros((SUBLANE, P), jnp.float32)
        aff = aff.at[0, :fo].set(b.reshape(-1))
        aff = aff.at[1, :fo].set(scale.reshape(-1))
        aff = aff.at[2, :fo].set(shift.reshape(-1))
        w_stack.append(w_p.astype(matmul_dtype))
        aff_stack.append(aff)
    w_all = jnp.stack(w_stack)        # (L, P, P)  matmul_dtype
    aff_all = jnp.stack(aff_stack)    # (L, 8, P)  f32

    if tb is None:
        tb, B_pad = _choose_batch_tile(B)
    else:
        assert tb % SUBLANE == 0, "batch tile must be a multiple of 8"
        B_pad = _round_up(B, tb)

    # bf16 input I/O (halves input DMA bytes); pad batch rows & feature lanes.
    x_p = jnp.zeros((B_pad, P), matmul_dtype).at[:B, :D].set(x.astype(matmul_dtype))

    out_pad = pl.pallas_call(
        _ae_kernel,
        out_shape=jax.ShapeDtypeStruct((B_pad, P), jnp.float32),
        grid_spec=pl.GridSpec(
            grid=(B_pad // tb,),
            in_specs=[
                pl.BlockSpec((tb, P), lambda i: (i, 0)),                  # x, tiled over batch
                pl.BlockSpec((n_layers, P, P), lambda i: (0, 0, 0)),      # weights, resident
                pl.BlockSpec((n_layers, SUBLANE, P), lambda i: (0, 0, 0)),# affine, resident
            ],
            out_specs=pl.BlockSpec((tb, P), lambda i: (i, 0)),
        ),
        compiler_params=pltpu.CompilerParams(
            dimension_semantics=("parallel",),   # batch tiles shard across TCs
        ),
    )(x_p, w_all, aff_all)
    return out_pad[:B, :D]


# ----------------------------------------------------------------------------
# Deterministic parameter construction (shapes follow the module's __init__)
# ----------------------------------------------------------------------------
def make_params(key, input_dim, hidden_dims):
    encoder_layers = [input_dim] + list(hidden_dims)
    decoder_layers = list(reversed(encoder_layers))
    layer_dims = list(zip(encoder_layers[:-1], encoder_layers[1:])) + list(
        zip(decoder_layers[:-1], decoder_layers[1:])
    )

    params = []
    for (fan_in, fan_out) in layer_dims:
        key, kw, kb, kg, kbe, km, kv = jax.random.split(key, 7)
        bound = 1.0 / jnp.sqrt(fan_in)
        w = jax.random.uniform(kw, (fan_in, fan_out), jnp.float32, -bound, bound)
        b = jax.random.uniform(kb, (1, fan_out), jnp.float32, -bound, bound)
        gamma = jax.random.uniform(kg, (1, fan_out), jnp.float32, 0.5, 1.5)
        beta = jax.random.uniform(kbe, (1, fan_out), jnp.float32, -0.5, 0.5)
        mean = 0.1 * jax.random.normal(km, (1, fan_out), jnp.float32)
        var = jax.random.uniform(kv, (1, fan_out), jnp.float32, 0.5, 1.5)
        params.append((w, b, gamma, beta, mean, var))
    return params


# Pure-JAX references for correctness checking.
def ref_forward_f32(x, params):
    h = x
    for (w, b, gamma, beta, mean, var) in params:
        z = jnp.maximum(h @ w + b, 0.0)
        h = (z - mean) * (gamma / jnp.sqrt(var + EPS)) + beta
    return h


def ref_forward_matmul_dtype(x, params, matmul_dtype=jnp.bfloat16):
    """Mirrors the kernel's numerics (bf16 input & MXU operands, f32 acc/epilogue)."""
    h = x.astype(matmul_dtype)
    for (w, b, gamma, beta, mean, var) in params:
        scale = gamma * jax.lax.rsqrt(var + EPS)
        shift = beta - mean * scale
        z = jnp.dot(h.astype(matmul_dtype), w.astype(matmul_dtype),
                    preferred_element_type=jnp.float32) + b
        z = jnp.maximum(z, 0.0)
        h = z * scale + shift
    return h


if __name__ == "__main__":
    key = jax.random.PRNGKey(0)
    key, kx = jax.random.split(key)

    # Shapes consistent with the module: input_dim=16, hidden_dims=[128, 64],
    # batch=32 (module default batch_size). Tile picks tb=16 -> grid=(2,).
    input_dim = 16
    hidden_dims = [128, 64]
    batch = 32

    x = jax.random.normal(kx, (batch, input_dim), jnp.float32)
    params = make_params(key, input_dim, hidden_dims)

    out = jax.block_until_ready(autoencoder_forward(x, params))
    assert out.shape == (batch, input_dim)

    # Tight check against a reference with identical bf16-matmul numerics.
    ref_bf16 = ref_forward_matmul_dtype(x, params)
    assert jnp.allclose(out, ref_bf16, atol=2e-3, rtol=2e-3), \
        "mismatch vs bf16-matched JAX reference"

    # Loose sanity check against the full-f32 PyTorch-equivalent reference.
    ref_f32 = ref_forward_f32(x, params)
    assert jnp.allclose(out, ref_f32, atol=1e-1, rtol=1e-1), \
        "mismatch vs f32 JAX reference"

    print("KERNEL_OK")
</pallas_src>

<mosaic_0001>
module attributes {stable_mosaic.version = 11 : i64} {
  func.func @_ae_kernel(%arg0: i32, %arg1: memref<16x128xbf16, #tpu.memory_space<vmem>>, %arg2: memref<4x128x128xbf16, #tpu.memory_space<vmem>>, %arg3: memref<4x8x128xf32, #tpu.memory_space<vmem>>, %arg4: memref<16x128xf32, #tpu.memory_space<vmem>>) attributes {dimension_semantics = [#tpu.dimension_semantics<parallel>], iteration_bounds = array<i64: 2>, scalar_prefetch = 0 : i64, scratch_operands = 0 : i64, tpu.core_type = #tpu.core_type<tc>, window_params = [{transform_indices = @transform_0, window_bounds = array<i64: 16, 128>}, {pipeline_mode = #tpu.pipeline_mode<synchronous>, transform_indices = @transform_1, window_bounds = array<i64: 4, 128, 128>}, {pipeline_mode = #tpu.pipeline_mode<synchronous>, transform_indices = @transform_2, window_bounds = array<i64: 4, 8, 128>}, {transform_indices = @transform_3, window_bounds = array<i64: 16, 128>}]} {
    %c0 = arith.constant 0 : index
    %c0_0 = arith.constant 0 : index
    %0 = vector.load %arg1[%c0, %c0_0] : memref<16x128xbf16, #tpu.memory_space<vmem>>, vector<16x128xbf16>
    %c0_1 = arith.constant 0 : index
    %c0_2 = arith.constant 0 : index
    %c0_3 = arith.constant 0 : index
    %1 = vector.load %arg3[%c0_1, %c0_2, %c0_3] : memref<4x8x128xf32, #tpu.memory_space<vmem>>, vector<1x8x128xf32>
    %2 = vector.shape_cast %1 : vector<1x8x128xf32> to vector<8x128xf32>
    %c0_4 = arith.constant 0 : index
    %c0_5 = arith.constant 0 : index
    %c0_6 = arith.constant 0 : index
    %3 = vector.load %arg2[%c0_4, %c0_5, %c0_6] : memref<4x128x128xbf16, #tpu.memory_space<vmem>>, vector<1x128x128xbf16>
    %4 = vector.shape_cast %3 : vector<1x128x128xbf16> to vector<128x128xbf16>
    %cst = arith.constant dense<0.000000e+00> : vector<16x128xf32>
    %5 = tpu.matmul %0, %4, %cst {dimension_numbers = #tpu.dot_dimension_numbers<[1], [0], [0], [1], [0, 0, 1, 1], [], []>} : vector<16x128xbf16>, vector<128x128xbf16>, vector<16x128xf32> -> vector<16x128xf32>
    %6 = vector.extract_strided_slice %2 {offsets = [0, 0], sizes = [1, 128], strides = [1, 1]} : vector<8x128xf32> to vector<1x128xf32>
    %7 = vector.broadcast %6 : vector<1x128xf32> to vector<16x128xf32>
    %8 = arith.addf %5, %7 : vector<16x128xf32>
    %cst_7 = arith.constant 0.000000e+00 : f32
    %9 = vector.broadcast %cst_7 : f32 to vector<16x128xf32>
    %10 = arith.maximumf %8, %9 : vector<16x128xf32>
    %11 = vector.extract_strided_slice %2 {offsets = [1, 0], sizes = [1, 128], strides = [1, 1]} : vector<8x128xf32> to vector<1x128xf32>
    %12 = vector.broadcast %11 : vector<1x128xf32> to vector<16x128xf32>
    %13 = arith.mulf %10, %12 : vector<16x128xf32>
    %14 = vector.extract_strided_slice %2 {offsets = [2, 0], sizes = [1, 128], strides = [1, 1]} : vector<8x128xf32> to vector<1x128xf32>
    %15 = vector.broadcast %14 : vector<1x128xf32> to vector<16x128xf32>
    %16 = arith.addf %13, %15 : vector<16x128xf32>
    %c1 = arith.constant 1 : index
    %c0_8 = arith.constant 0 : index
    %c0_9 = arith.constant 0 : index
    %17 = vector.load %arg3[%c1, %c0_8, %c0_9] : memref<4x8x128xf32, #tpu.memory_space<vmem>>, vector<1x8x128xf32>
    %18 = vector.shape_cast %17 : vector<1x8x128xf32> to vector<8x128xf32>
    %19 = arith.truncf %16 : vector<16x128xf32> to vector<16x128xbf16>
    %c1_10 = arith.constant 1 : index
    %c0_11 = arith.constant 0 : index
    %c0_12 = arith.constant 0 : index
    %20 = vector.load %arg2[%c1_10, %c0_11, %c0_12] : memref<4x128x128xbf16, #tpu.memory_space<vmem>>, vector<1x128x128xbf16>
    %21 = vector.shape_cast %20 : vector<1x128x128xbf16> to vector<128x128xbf16>
    %cst_13 = arith.constant dense<0.000000e+00> : vector<16x128xf32>
    %22 = tpu.matmul %19, %21, %cst_13 {dimension_numbers = #tpu.dot_dimension_numbers<[1], [0], [0], [1], [0, 0, 1, 1], [], []>} : vector<16x128xbf16>, vector<128x128xbf16>, vector<16x128xf32> -> vector<16x128xf32>
    %23 = vector.extract_strided_slice %18 {offsets = [0, 0], sizes = [1, 128], strides = [1, 1]} : vector<8x128xf32> to vector<1x128xf32>
    %24 = vector.broadcast %23 : vector<1x128xf32> to vector<16x128xf32>
    %25 = arith.addf %22, %24 : vector<16x128xf32>
    %cst_14 = arith.constant 0.000000e+00 : f32
    %26 = vector.broadcast %cst_14 : f32 to vector<16x128xf32>
    %27 = arith.maximumf %25, %26 : vector<16x128xf32>
    %28 = vector.extract_strided_slice %18 {offsets = [1, 0], sizes = [1, 128], strides = [1, 1]} : vector<8x128xf32> to vector<1x128xf32>
    %29 = vector.broadcast %28 : vector<1x128xf32> to vector<16x128xf32>
    %30 = arith.mulf %27, %29 : vector<16x128xf32>
    %31 = vector.extract_strided_slice %18 {offsets = [2, 0], sizes = [1, 128], strides = [1, 1]} : vector<8x128xf32> to vector<1x128xf32>
    %32 = vector.broadcast %31 : vector<1x128xf32> to vector<16x128xf32>
    %33 = arith.addf %30, %32 : vector<16x128xf32>
    %c2 = arith.constant 2 : index
    %c0_15 = arith.constant 0 : index
    %c0_16 = arith.constant 0 : index
    %34 = vector.load %arg3[%c2, %c0_15, %c0_16] : memref<4x8x128xf32, #tpu.memory_space<vmem>>, vector<1x8x128xf32>
    %35 = vector.shape_cast %34 : vector<1x8x128xf32> to vector<8x128xf32>
    %36 = arith.truncf %33 : vector<16x128xf32> to vector<16x128xbf16>
    %c2_17 = arith.constant 2 : index
    %c0_18 = arith.constant 0 : index
    %c0_19 = arith.constant 0 : index
    %37 = vector.load %arg2[%c2_17, %c0_18, %c0_19] : memref<4x128x128xbf16, #tpu.memory_space<vmem>>, vector<1x128x128xbf16>
    %38 = vector.shape_cast %37 : vector<1x128x128xbf16> to vector<128x128xbf16>
    %cst_20 = arith.constant dense<0.000000e+00> : vector<16x128xf32>
    %39 = tpu.matmul %36, %38, %cst_20 {dimension_numbers = #tpu.dot_dimension_numbers<[1], [0], [0], [1], [0, 0, 1, 1], [], []>} : vector<16x128xbf16>, vector<128x128xbf16>, vector<16x128xf32> -> vector<16x128xf32>
    %40 = vector.extract_strided_slice %35 {offsets = [0, 0], sizes = [1, 128], strides = [1, 1]} : vector<8x128xf32> to vector<1x128xf32>
    %41 = vector.broadcast %40 : vector<1x128xf32> to vector<16x128xf32>
    %42 = arith.addf %39, %41 : vector<16x128xf32>
    %cst_21 = arith.constant 0.000000e+00 : f32
    %43 = vector.broadcast %cst_21 : f32 to vector<16x128xf32>
    %44 = arith.maximumf %42, %43 : vector<16x128xf32>
    %45 = vector.extract_strided_slice %35 {offsets = [1, 0], sizes = [1, 128], strides = [1, 1]} : vector<8x128xf32> to vector<1x128xf32>
    %46 = vector.broadcast %45 : vector<1x128xf32> to vector<16x128xf32>
    %47 = arith.mulf %44, %46 : vector<16x128xf32>
    %48 = vector.extract_strided_slice %35 {offsets = [2, 0], sizes = [1, 128], strides = [1, 1]} : vector<8x128xf32> to vector<1x128xf32>
    %49 = vector.broadcast %48 : vector<1x128xf32> to vector<16x128xf32>
    %50 = arith.addf %47, %49 : vector<16x128xf32>
    %c3 = arith.constant 3 : index
    %c0_22 = arith.constant 0 : index
    %c0_23 = arith.constant 0 : index
    %51 = vector.load %arg3[%c3, %c0_22, %c0_23] : memref<4x8x128xf32, #tpu.memory_space<vmem>>, vector<1x8x128xf32>
    %52 = vector.shape_cast %51 : vector<1x8x128xf32> to vector<8x128xf32>
    %53 = arith.truncf %50 : vector<16x128xf32> to vector<16x128xbf16>
    %c3_24 = arith.constant 3 : index
    %c0_25 = arith.constant 0 : index
    %c0_26 = arith.constant 0 : index
    %54 = vector.load %arg2[%c3_24, %c0_25, %c0_26] : memref<4x128x128xbf16, #tpu.memory_space<vmem>>, vector<1x128x128xbf16>
    %55 = vector.shape_cast %54 : vector<1x128x128xbf16> to vector<128x128xbf16>
    %cst_27 = arith.constant dense<0.000000e+00> : vector<16x128xf32>
    %56 = tpu.matmul %53, %55, %cst_27 {dimension_numbers = #tpu.dot_dimension_numbers<[1], [0], [0], [1], [0, 0, 1, 1], [], []>} : vector<16x128xbf16>, vector<128x128xbf16>, vector<16x128xf32> -> vector<16x128xf32>
    %57 = vector.extract_strided_slice %52 {offsets = [0, 0], sizes = [1, 128], strides = [1, 1]} : vector<8x128xf32> to vector<1x128xf32>
    %58 = vector.broadcast %57 : vector<1x128xf32> to vector<16x128xf32>
    %59 = arith.addf %56, %58 : vector<16x128xf32>
    %cst_28 = arith.constant 0.000000e+00 : f32
    %60 = vector.broadcast %cst_28 : f32 to vector<16x128xf32>
    %61 = arith.maximumf %59, %60 : vector<16x128xf32>
    %62 = vector.extract_strided_slice %52 {offsets = [1, 0], sizes = [1, 128], strides = [1, 1]} : vector<8x128xf32> to vector<1x128xf32>
    %63 = vector.broadcast %62 : vector<1x128xf32> to vector<16x128xf32>
    %64 = arith.mulf %61, %63 : vector<16x128xf32>
    %65 = vector.extract_strided_slice %52 {offsets = [2, 0], sizes = [1, 128], strides = [1, 1]} : vector<8x128xf32> to vector<1x128xf32>
    %66 = vector.broadcast %65 : vector<1x128xf32> to vector<16x128xf32>
    %67 = arith.addf %64, %66 : vector<16x128xf32>
    %c0_29 = arith.constant 0 : index
    %c0_30 = arith.constant 0 : index
    %68 = vector.load %arg4[%c0_29, %c0_30] : memref<16x128xf32, #tpu.memory_space<vmem>>, vector<16x128xf32>
    tpu.vector_store %arg4[%c0_29, %c0_30], %67 {strides = array<i32>} : memref<16x128xf32, #tpu.memory_space<vmem>>, vector<16x128xf32>,
    return
  }
  func.func @transform_0(%arg0: i32) -> (i32, i32) {
    %c0_i32 = arith.constant 0 : i32
    %c0_i32_0 = arith.constant 0 : i32
    return %arg0, %c0_i32 : i32, i32
  }
  func.func @transform_1(%arg0: i32) -> (i32, i32, i32) {
    %c0_i32 = arith.constant 0 : i32
    %c0_i32_0 = arith.constant 0 : i32
    %c0_i32_1 = arith.constant 0 : i32
    %c0_i32_2 = arith.constant 0 : i32
    return %c0_i32, %c0_i32_0, %c0_i32_1 : i32, i32, i32
  }
  func.func @transform_2(%arg0: i32) -> (i32, i32, i32) {
    %c0_i32 = arith.constant 0 : i32
    %c0_i32_0 = arith.constant 0 : i32
    %c0_i32_1 = arith.constant 0 : i32
    %c0_i32_2 = arith.constant 0 : i32
    return %c0_i32, %c0_i32_0, %c0_i32_1 : i32, i32, i32
  }
  func.func @transform_3(%arg0: i32) -> (i32, i32) {
    %c0_i32 = arith.constant 0 : i32
    %c0_i32_0 = arith.constant 0 : i32
    return %arg0, %c0_i32 : i32, i32
  }
}

</mosaic_0001>

<llo_original>
// kernel: tpu_custom_call.1
$region0: #{tpu_custom_call.1}
  #allocation0 [shape = 'u32[]', space=smem, size = 0x4, offset = 0x4, fixed_abs, tag = 'smem constant byte address 0x4 - core index']
  #allocation1 [shape = 'u32[72,128]{1,0:T(1,128)}', space=vmem, size = 0x9000, scoped, tag = 'internal scratch']
  %s0 = inlined_call_operand.hbm [shape: bf16[32,128], index: 0, kind: input, shape index: {}]
  %s1 = inlined_call_operand.hbm [shape: bf16[4,128,128], index: 1, kind: input, shape index: {}]
  %s2 = inlined_call_operand.hbm [shape: f32[4,8,128], index: 2, kind: input, shape index: {}]
  %s3 = inlined_call_operand.hbm [shape: f32[32,128], index: 3, kind: output, shape index: {}]
  %s4 = sld [smem:[#allocation0]]
  $region57: #{tpu_custom_call.1} parent=0
    _
  %s6 = ssub.s32 1, %s4
  %s7 = scalar_select 0, %s6, %s4
  $region1: #{tpu_custom_call.1} parent=0
    #allocation2 [shape = 'u8[8192]{0}', space=vmem, size = 0x2000, scoped, tag = 'input window, operand 0']
    #allocation3 [shape = 's32[2]{0}', space=sflag, size = 0x8, scoped, tag = 'scoped memory for tpu_custom_call.1']
    #allocation4 [shape = 's32[2]{0}', space=sflag, size = 0x8, scoped, tag = 'scoped memory for tpu_custom_call.1']
    #allocation5 [shape = 'u8[131072]{0}', space=vmem, size = 0x20000, scoped, tag = 'input window, operand 1, single buffered']
    #allocation6 [shape = 's32[1]{0}', space=sflag, size = 0x4, scoped, tag = 'scoped memory for tpu_custom_call.1']
    #allocation7 [shape = 'u8[16384]{0}', space=vmem, size = 0x4000, scoped, tag = 'input window, operand 2, single buffered']
    #allocation8 [shape = 'u8[16384]{0}', space=vmem, size = 0x4000, scoped, tag = 'output window, operand 0']
    %8 = vsyncpa [#allocation3], 0
    %s9 = scalar_lea.sflag [#allocation3], 1
    %10 = vsyncpa %s9, 0
    %11 = vsyncpa [#allocation6], 0
    %12 = vsyncpa [#allocation4], 0
    %s13 = scalar_lea.sflag [#allocation4], 1
    %14 = vsyncpa %s13, 0
    loop: start=0, step=1, limit=4
    $region2: #{tpu_custom_call.1} parent=1 // loop_pre_header
      _
    $region3: #{tpu_custom_call.1} parent=1 // loop_header
      %s16 = sphi 0, %s20
      %p17 = scmp.ge.s32.totalorder %s16, 4
      %s26 = sphi 0, %s28
      %s29 = sphi 0, %s26
      %s30 = sphi 0, %s29
      %s46 = sphi 0, %s30
      %s50 = sphi 0, %s50
      %s52 = sphi 0, %s50
      %s53 = sphi 0, %s52
      %s67 = sphi 0, %s53
      %s71 = sphi 0, %s71
      %s73 = sphi 0, %s71
      %s74 = sphi 0, %s73
      %s88 = sphi 0, %s74
      %s94 = sphi 0, %s96
      %s97 = sphi 0, %s94
      %s98 = sphi 0, %s97
      %s114 = sphi 0, %s98
    $region4: #{tpu_custom_call.1} parent=1 // loop_header_branch
      %19 = sbr.rel (%p17) target = $region8
    $region5: #{tpu_custom_call.1} parent=1 // loop_body
      %s21 = ssub.s32 %s16, 1
      %s22 = ssub.s32 %s16, 2
      %s23 = sadd.s32 %s16, 1
      %s24 = ssub.s32 %s16, %s23
      %p25 = scmp.eq.s32.totalorder %s24, 0
      %s27 = sadd.s32 %s26, 1
      %s28 = scalar_select %p25, %s26, %s27
      %p31 = pneg %p25
      %p32 = scmp.eq.s32.totalorder %s16, 1
      %p33 = por %p31, %p32
      %p34 = scmp.ne.s32.totalorder %s26, %s29
      %p35 = scmp.eq.s32.totalorder %s16, 0
      %p36 = por %p34, %p35
      %p37 = scmp.ne.s32.totalorder %s26, %s29
      %p38 = scmp.eq.s32.totalorder %s21, 1
      %p39 = por %p37, %p38
      %p40 = scmp.ne.s32.totalorder %s29, %s30
      %p41 = scmp.eq.s32.totalorder %s21, 0
      %p42 = por %p40, %p41
      %p43 = scmp.ne.s32.totalorder %s29, %s30
      %p44 = scmp.eq.s32.totalorder %s22, 1
      %p45 = por %p43, %p44
      %p47 = scmp.ne.s32.totalorder %s30, %s46
      %p48 = scmp.eq.s32.totalorder %s22, 0
      %p49 = por %p47, %p48
      %s51 = sadd.s32 %s50, 1
      %p54 = scmp.eq.s32.totalorder %s16, 1
      %p55 = scmp.ne.s32.totalorder %s50, %s52
      %p56 = scmp.eq.s32.totalorder %s16, 0
      %p57 = por %p55, %p56
      %p58 = scmp.ne.s32.totalorder %s50, %s52
      %p59 = scmp.eq.s32.totalorder %s21, 1
      %p60 = por %p58, %p59
      %p61 = scmp.ne.s32.totalorder %s52, %s53
      %p62 = scmp.eq.s32.totalorder %s21, 0
      %p63 = por %p61, %p62
      %p64 = scmp.ne.s32.totalorder %s52, %s53
      %p65 = scmp.eq.s32.totalorder %s22, 1
      %p66 = por %p64, %p65
      %p68 = scmp.ne.s32.totalorder %s53, %s67
      %p69 = scmp.eq.s32.totalorder %s22, 0
      %p70 = por %p68, %p69
      %s72 = sadd.s32 %s71, 1
      %p75 = scmp.eq.s32.totalorder %s16, 1
      %p76 = scmp.ne.s32.totalorder %s71, %s73
      %p77 = scmp.eq.s32.totalorder %s16, 0
      %p78 = por %p76, %p77
      %p79 = scmp.ne.s32.totalorder %s71, %s73
      %p80 = scmp.eq.s32.totalorder %s21, 1
      %p81 = por %p79, %p80
      %p82 = scmp.ne.s32.totalorder %s73, %s74
      %p83 = scmp.eq.s32.totalorder %s21, 0
      %p84 = por %p82, %p83
      %p85 = scmp.ne.s32.totalorder %s73, %s74
      %p86 = scmp.eq.s32.totalorder %s22, 1
      %p87 = por %p85, %p86
      %p89 = scmp.ne.s32.totalorder %s74, %s88
      %p90 = scmp.eq.s32.totalorder %s22, 0
      %p91 = por %p89, %p90
      %s92 = ssub.s32 %s16, %s23
      %p93 = scmp.eq.s32.totalorder %s92, 0
      %s95 = sadd.s32 %s94, 1
      %s96 = scalar_select %p93, %s94, %s95
      %p99 = pneg %p93
      %p100 = scmp.eq.s32.totalorder %s16, 1
      %p101 = por %p99, %p100
      %p102 = scmp.ne.s32.totalorder %s94, %s97
      %p103 = scmp.eq.s32.totalorder %s16, 0
      %p104 = por %p102, %p103
      %p105 = scmp.ne.s32.totalorder %s94, %s97
      %p106 = scmp.eq.s32.totalorder %s21, 1
      %p107 = por %p105, %p106
      %p108 = scmp.ne.s32.totalorder %s97, %s98
      %p109 = scmp.eq.s32.totalorder %s21, 0
      %p110 = por %p108, %p109
      %p111 = scmp.ne.s32.totalorder %s97, %s98
      %p112 = scmp.eq.s32.totalorder %s22, 1
      %p113 = por %p111, %p112
      %p115 = scmp.ne.s32.totalorder %s98, %s114
      %p116 = scmp.eq.s32.totalorder %s22, 0
      %p117 = por %p115, %p116
      %p118 = scmp.le.s32.totalorder 1, %s16
      %p119 = scmp.lt.s32.totalorder %s16, 3
      %p120 = pnand %p118, %p119
      %p121 = pneg %p120
      // Predicated region
      $region9: #{tpu_custom_call.1} parent=5 // pred_check
        _
      $region10: #{tpu_custom_call.1} parent=5 // pred_check_branch
        %123 = sbr.rel (%p120) target = $region12
      $region11: #{tpu_custom_call.1} parent=5 // pred_region
        %s124 = ssub.s32 %s16, 1
        // Predicated region
        $region13: #{tpu_custom_call.1} parent=11 // pred_check
          %p125 = pneg %p63
        $region14: #{tpu_custom_call.1} parent=11 // pred_check_branch
          %127 = sbr.rel (%p125) target = $region16
        $region15: #{tpu_custom_call.1} parent=11 // pred_region
          %129 = vsyncadd [#allocation6], 0
          %s130 = sshll.u32 %s1, 4
          %s131 = int_to_ptr.hbm [resolvable:$true] %s130
          %s132 = sshll.u32 [#allocation5], 4
          %s133 = int_to_ptr.vmem [resolvable:$true] %s132
          %138 = dma.hbm_to_vmem [thread:$0]  %s131, 4096, %s133, [#allocation6], 64, 64, 4
        $region16: #{tpu_custom_call.1} parent=11 // pred_fallthru
          _
        // Predicated region
        $region17: #{tpu_custom_call.1} parent=11 // pred_check
          %p139 = pneg %p84
        $region18: #{tpu_custom_call.1} parent=11 // pred_check_branch
          %141 = sbr.rel (%p139) target = $region20
        $region19: #{tpu_custom_call.1} parent=11 // pred_region
          %143 = vsyncadd [#allocation6], 0
          %s144 = sshll.u32 %s2, 4
          %s145 = int_to_ptr.hbm [resolvable:$true] %s144
          %s146 = sshll.u32 [#allocation7], 4
          %s147 = int_to_ptr.vmem [resolvable:$true] %s146
          %152 = dma.hbm_to_vmem [thread:$0]  %s145, 512, %s147, [#allocation6], 128, 128, 8
        $region20: #{tpu_custom_call.1} parent=11 // pred_fallthru
          _
      $region12: #{tpu_custom_call.1} parent=5 // pred_fallthru
        _
      %p153 = scmp.lt.s32.totalorder %s16, 2
      // Predicated region
      $region21: #{tpu_custom_call.1} parent=5 // pred_check
        %p154 = pneg %p153
      $region22: #{tpu_custom_call.1} parent=5 // pred_check_branch
        %156 = sbr.rel (%p154) target = $region24
      $region23: #{tpu_custom_call.1} parent=5 // pred_region
        // Predicated region
        $region25: #{tpu_custom_call.1} parent=23 // pred_check
          %p157 = pneg %p36
        $region26: #{tpu_custom_call.1} parent=23 // pred_check_branch
          %159 = sbr.rel (%p157) target = $region28
        $region27: #{tpu_custom_call.1} parent=23 // pred_region
          %s160 = sand.u32 %s26, 1
          %s161 = scalar_lea.sflag [#allocation3], %s160
          %s162 = sand.u32 %s26, 1
          %s163 = smul.addr %s162, 8
          %s164 = scalar_lea.vmem [#allocation2], %s163
          %s165 = smul.u32 2, %s16
          %167 = vsyncadd %s161, 0
          %s168 = smul.addr %s165, 4
          %s169 = scalar_lea.hbm %s0, %s168
          %s170 = sshll.u32 %s169, 4
          %s171 = int_to_ptr.hbm [resolvable:$true] %s170
          %s172 = sshll.u32 %s164, 4
          %s173 = int_to_ptr.vmem [resolvable:$true] %s172
          %178 = dma.hbm_to_vmem [thread:$0]  %s171, 128, %s173, %s161, 64, 64, 4
        $region28: #{tpu_custom_call.1} parent=23 // pred_fallthru
          _
      $region24: #{tpu_custom_call.1} parent=5 // pred_fallthru
        _
      %p179 = scmp.le.s32.totalorder 1, %s16
      %p180 = scmp.lt.s32.totalorder %s16, 3
      %p181 = pnand %p179, %p180
      %p182 = pneg %p181
      // Predicated region
      $region29: #{tpu_custom_call.1} parent=5 // pred_check
        _
      $region30: #{tpu_custom_call.1} parent=5 // pred_check_branch
        %184 = sbr.rel (%p181) target = $region32
      $region31: #{tpu_custom_call.1} parent=5 // pred_region
        %s185 = ssub.s32 %s16, 1
        %s186 = sand.u32 %s29, 1
        %s187 = scalar_lea.sflag [#allocation3], %s186
        %s188 = sand.u32 %s29, 1
        %s189 = smul.addr %s188, 8
        %s190 = scalar_lea.vmem [#allocation2], %s189
        // Predicated region
        $region33: #{tpu_custom_call.1} parent=31 // pred_check
          %p191 = pneg %p42
        $region34: #{tpu_custom_call.1} parent=31 // pred_check_branch
          %193 = sbr.rel (%p191) target = $region36
        $region35: #{tpu_custom_call.1} parent=31 // pred_region
          %195 = dma.done %s187, 128
        $region36: #{tpu_custom_call.1} parent=31 // pred_fallthru
          _
        // Predicated region
        $region37: #{tpu_custom_call.1} parent=31 // pred_check
          %p196 = pneg %p63
        $region38: #{tpu_custom_call.1} parent=31 // pred_check_branch
          %198 = sbr.rel (%p196) target = $region40
        $region39: #{tpu_custom_call.1} parent=31 // pred_region
          %200 = dma.done [#allocation6], 4096
        $region40: #{tpu_custom_call.1} parent=31 // pred_fallthru
          _
        // Predicated region
        $region41: #{tpu_custom_call.1} parent=31 // pred_check
          %p201 = pneg %p84
        $region42: #{tpu_custom_call.1} parent=31 // pred_check_branch
          %203 = sbr.rel (%p201) target = $region44
        $region43: #{tpu_custom_call.1} parent=31 // pred_region
          %205 = dma.done [#allocation6], 512
        $region44: #{tpu_custom_call.1} parent=31 // pred_fallthru
          _
        %s206 = sand.u32 %s29, 1
        %s207 = scalar_lea.sflag [#allocation3], %s206
        %s208 = sand.u32 %s29, 1
        %s209 = smul.addr %s208, 8
        %s210 = scalar_lea.vmem [#allocation2], %s209
        %p211 = pneg %p42
        %p212 = pneg %p39
        %p213 = pneg %p63
        %p214 = pneg %p60
        %p215 = pneg %p84
        %p216 = pneg %p81
        %p217 = pneg %p110
        %p218 = pneg %p107
        %s219 = sand.u32 %s97, 1
        %s220 = scalar_lea.sflag [#allocation4], %s219
        %s221 = sand.u32 %s97, 1
        %s222 = smul.addr %s221, 16
        %s223 = scalar_lea.vmem [#allocation8], %s222
        %s224 = smul.u32 2, %s21
        %s225 = smul.u32 2, %s21
        %v226 = vld [vmem:[%s190] sm:$0xf]
        %v227 = vld [vmem:[%s190 + $0x4] sm:$0xf]
        %v228 = vld [vmem:[#allocation7] sm:$0xff]
        %v229 = vld [vmem:[#allocation5] sm:$0xf]
        %v230 = vld [vmem:[#allocation5 + $0x4] sm:$0xf]
        %v231 = vld [vmem:[#allocation5 + $0x8] sm:$0xf]
        %v232 = vld [vmem:[#allocation5 + $0xc] sm:$0xf]
        %v233 = vld [vmem:[#allocation5 + $0x10] sm:$0xf]
        %v234 = vld [vmem:[#allocation5 + $0x14] sm:$0xf]
        %v235 = vld [vmem:[#allocation5 + $0x18] sm:$0xf]
        %v236 = vld [vmem:[#allocation5 + $0x1c] sm:$0xf]
        %v237 = vld [vmem:[#allocation5 + $0x20] sm:$0xf]
        %v238 = vld [vmem:[#allocation5 + $0x24] sm:$0xf]
        %v239 = vld [vmem:[#allocation5 + $0x28] sm:$0xf]
        %v240 = vld [vmem:[#allocation5 + $0x2c] sm:$0xf]
        %v241 = vld [vmem:[#allocation5 + $0x30] sm:$0xf]
        %v242 = vld [vmem:[#allocation5 + $0x34] sm:$0xf]
        %v243 = vld [vmem:[#allocation5 + $0x38] sm:$0xf]
        %v244 = vld [vmem:[#allocation5 + $0x3c] sm:$0xf]
        %v245 = vperm.slane %v228, 0
        %v248 = vunpack.c.l.b16 %v226
        %v249 = vunpack.c.l.b16 %v227
        %v250 = vpack.c.b16 %v249, %v248
        %v268 = vunpack.c.l.b16 %v229
        %v269 = vunpack.c.l.b16 %v230
        %v270 = vunpack.c.l.b16 %v231
        %v271 = vunpack.c.l.b16 %v232
        %v272 = vunpack.c.l.b16 %v233
        %v273 = vunpack.c.l.b16 %v234
        %v274 = vunpack.c.l.b16 %v235
        %v275 = vunpack.c.l.b16 %v236
        %v276 = vunpack.c.l.b16 %v237
        %v277 = vunpack.c.l.b16 %v238
        %v278 = vunpack.c.l.b16 %v239
        %v279 = vunpack.c.l.b16 %v240
        %v280 = vunpack.c.l.b16 %v241
        %v281 = vunpack.c.l.b16 %v242
        %v282 = vunpack.c.l.b16 %v243
        %v283 = vunpack.c.l.b16 %v244
        %v284 = vpack.c.b16 %v269, %v268
        %v285 = vpack.c.b16 %v271, %v270
        %v286 = vpack.c.b16 %v273, %v272
        %v287 = vpack.c.b16 %v275, %v274
        %v288 = vpack.c.b16 %v277, %v276
        %v289 = vpack.c.b16 %v279, %v278
        %v290 = vpack.c.b16 %v281, %v280
        %v291 = vpack.c.b16 %v283, %v282
        %300 = vmatpush.bf16.msra.mxu0 %v291
        %301 = vmatpush.bf16.msra.mxu0 %v290
        %302 = vmatpush.bf16.msra.mxu0 %v289
        %303 = vmatpush.bf16.msra.mxu0 %v288
        %304 = vmatpush.bf16.msra.mxu0 %v287
        %305 = vmatpush.bf16.msra.mxu0 %v286
        %306 = vmatpush.bf16.msra.mxu0 %v285
        %307 = vmatpush.bf16.msra.mxu0 %v284
        %308 = vmatmul.bf16.gmra.mxu0 %v250
        %v309 = vpop.f32.mrf.mxu0
        %v310 = vadd.f32 %v245, %v309
        %v311 = vpop.f32.mrf.mxu0
        %v312 = vadd.f32 %v245, %v311
        %313 = vdwg.mxu0
        %v314 = vmax.f32 %v310, 0.0
        %v315 = vmax.f32 %v312, 0.0
        %v316 = vperm.slane %v228, 1
        %v317 = vmul.f32 %v314, %v316
        %v318 = vmul.f32 %v315, %v316
        %v319 = vperm.slane %v228, 2
        %v320 = vadd.f32 %v317, %v319
        %v321 = vadd.f32 %v318, %v319
        %s322 = scalar_lea.vmem [#allocation7], 8
        %v323 = vld [vmem:[%s322] sm:$0xff]
        %v324 = vpack.c.bf16 %v321, %v320
        %s325 = scalar_lea.vmem [#allocation5], 64
        %v326 = vld [vmem:[%s325] sm:$0xf]
        %v327 = vld [vmem:[%s325 + $0x4] sm:$0xf]
        %v328 = vld [vmem:[%s325 + $0x8] sm:$0xf]
        %v329 = vld [vmem:[%s325 + $0xc] sm:$0xf]
        %v330 = vld [vmem:[%s325 + $0x10] sm:$0xf]
        %v331 = vld [vmem:[%s325 + $0x14] sm:$0xf]
        %v332 = vld [vmem:[%s325 + $0x18] sm:$0xf]
        %v333 = vld [vmem:[%s325 + $0x1c] sm:$0xf]
        %v334 = vld [vmem:[%s325 + $0x20] sm:$0xf]
        %v335 = vld [vmem:[%s325 + $0x24] sm:$0xf]
        %v336 = vld [vmem:[%s325 + $0x28] sm:$0xf]
        %v337 = vld [vmem:[%s325 + $0x2c] sm:$0xf]
        %v338 = vld [vmem:[%s325 + $0x30] sm:$0xf]
        %v339 = vld [vmem:[%s325 + $0x34] sm:$0xf]
        %v340 = vld [vmem:[%s325 + $0x38] sm:$0xf]
        %v341 = vld [vmem:[%s325 + $0x3c] sm:$0xf]
        %v342 = vperm.slane %v323, 0
        %v359 = vunpack.c.l.b16 %v326
        %v360 = vunpack.c.l.b16 %v327
        %v361 = vunpack.c.l.b16 %v328
        %v362 = vunpack.c.l.b16 %v329
        %v363 = vunpack.c.l.b16 %v330
        %v364 = vunpack.c.l.b16 %v331
        %v365 = vunpack.c.l.b16 %v332
        %v366 = vunpack.c.l.b16 %v333
        %v367 = vunpack.c.l.b16 %v334
        %v368 = vunpack.c.l.b16 %v335
        %v369 = vunpack.c.l.b16 %v336
        %v370 = vunpack.c.l.b16 %v337
        %v371 = vunpack.c.l.b16 %v338
        %v372 = vunpack.c.l.b16 %v339
        %v373 = vunpack.c.l.b16 %v340
        %v374 = vunpack.c.l.b16 %v341
        %v375 = vpack.c.b16 %v360, %v359
        %v376 = vpack.c.b16 %v362, %v361
        %v377 = vpack.c.b16 %v364, %v363
        %v378 = vpack.c.b16 %v366, %v365
        %v379 = vpack.c.b16 %v368, %v367
        %v380 = vpack.c.b16 %v370, %v369
        %v381 = vpack.c.b16 %v372, %v371
        %v382 = vpack.c.b16 %v374, %v373
        %391 = vmatpush.bf16.msra.mxu0 %v382
        %392 = vmatpush.bf16.msra.mxu0 %v381
        %393 = vmatpush.bf16.msra.mxu0 %v380
        %394 = vmatpush.bf16.msra.mxu0 %v379
        %395 = vmatpush.bf16.msra.mxu0 %v378
        %396 = vmatpush.bf16.msra.mxu0 %v377
        %397 = vmatpush.bf16.msra.mxu0 %v376
        %398 = vmatpush.bf16.msra.mxu0 %v375
        %399 = vmatmul.bf16.gmra.mxu0 %v324
        %v400 = vpop.f32.mrf.mxu0
        %v401 = vadd.f32 %v342, %v400
        %v402 = vpop.f32.mrf.mxu0
        %v403 = vadd.f32 %v342, %v402
        %404 = vdwg.mxu0
        %v405 = vmax.f32 %v401, 0.0
        %v406 = vmax.f32 %v403, 0.0
        %v407 = vperm.slane %v323, 1
        %v408 = vmul.f32 %v405, %v407
        %v409 = vmul.f32 %v406, %v407
        %v410 = vperm.slane %v323, 2
        %v411 = vadd.f32 %v408, %v410
        %v412 = vadd.f32 %v409, %v410
        %s413 = scalar_lea.vmem [#allocation7], 16
        %v414 = vld [vmem:[%s413] sm:$0xff]
        %v415 = vpack.c.bf16 %v412, %v411
        %s416 = scalar_lea.vmem [#allocation5], 128
        %v417 = vld [vmem:[%s416] sm:$0xf]
        %v418 = vld [vmem:[%s416 + $0x4] sm:$0xf]
        %v419 = vld [vmem:[%s416 + $0x8] sm:$0xf]
        %v420 = vld [vmem:[%s416 + $0xc] sm:$0xf]
        %v421 = vld [vmem:[%s416 + $0x10] sm:$0xf]
        %v422 = vld [vmem:[%s416 + $0x14] sm:$0xf]
        %v423 = vld [vmem:[%s416 + $0x18] sm:$0xf]
        %v424 = vld [vmem:[%s416 + $0x1c] sm:$0xf]
        %v425 = vld [vmem:[%s416 + $0x20] sm:$0xf]
        %v426 = vld [vmem:[%s416 + $0x24] sm:$0xf]
        %v427 = vld [vmem:[%s416 + $0x28] sm:$0xf]
        %v428 = vld [vmem:[%s416 + $0x2c] sm:$0xf]
        %v429 = vld [vmem:[%s416 + $0x30] sm:$0xf]
        %v430 = vld [vmem:[%s416 + $0x34] sm:$0xf]
        %v431 = vld [vmem:[%s416 + $0x38] sm:$0xf]
        %v432 = vld [vmem:[%s416 + $0x3c] sm:$0xf]
        %v433 = vperm.slane %v414, 0
        %v450 = vunpack.c.l.b16 %v417
        %v451 = vunpack.c.l.b16 %v418
        %v452 = vunpack.c.l.b16 %v419
        %v453 = vunpack.c.l.b16 %v420
        %v454 = vunpack.c.l.b16 %v421
        %v455 = vunpack.c.l.b16 %v422
        %v456 = vunpack.c.l.b16 %v423
        %v457 = vunpack.c.l.b16 %v424
        %v458 = vunpack.c.l.b16 %v425
        %v459 = vunpack.c.l.b16 %v426
        %v460 = vunpack.c.l.b16 %v427
        %v461 = vunpack.c.l.b16 %v428
        %v462 = vunpack.c.l.b16 %v429
        %v463 = vunpack.c.l.b16 %v430
        %v464 = vunpack.c.l.b16 %v431
        %v465 = vunpack.c.l.b16 %v432
        %v466 = vpack.c.b16 %v451, %v450
        %v467 = vpack.c.b16 %v453, %v452
        %v468 = vpack.c.b16 %v455, %v454
        %v469 = vpack.c.b16 %v457, %v456
        %v470 = vpack.c.b16 %v459, %v458
        %v471 = vpack.c.b16 %v461, %v460
        %v472 = vpack.c.b16 %v463, %v462
        %v473 = vpack.c.b16 %v465, %v464
        %482 = vmatpush.bf16.msra.mxu0 %v473
        %483 = vmatpush.bf16.msra.mxu0 %v472
        %484 = vmatpush.bf16.msra.mxu0 %v471
        %485 = vmatpush.bf16.msra.mxu0 %v470
        %486 = vmatpush.bf16.msra.mxu0 %v469
        %487 = vmatpush.bf16.msra.mxu0 %v468
        %488 = vmatpush.bf16.msra.mxu0 %v467
        %489 = vmatpush.bf16.msra.mxu0 %v466
        %490 = vmatmul.bf16.gmra.mxu0 %v415
        %v491 = vpop.f32.mrf.mxu0
        %v492 = vadd.f32 %v433, %v491
        %v493 = vpop.f32.mrf.mxu0
        %v494 = vadd.f32 %v433, %v493
        %495 = vdwg.mxu0
        %v496 = vmax.f32 %v492, 0.0
        %v497 = vmax.f32 %v494, 0.0
        %v498 = vperm.slane %v414, 1
        %v499 = vmul.f32 %v496, %v498
        %v500 = vmul.f32 %v497, %v498
        %v501 = vperm.slane %v414, 2
        %v502 = vadd.f32 %v499, %v501
        %v503 = vadd.f32 %v500, %v501
        %s504 = scalar_lea.vmem [#allocation7], 24
        %v505 = vld [vmem:[%s504] sm:$0xff]
        %v506 = vpack.c.bf16 %v503, %v502
        %s507 = scalar_lea.vmem [#allocation5], 192
        %v508 = vld [vmem:[%s507] sm:$0xf]
        %v509 = vld [vmem:[%s507 + $0x4] sm:$0xf]
        %v510 = vld [vmem:[%s507 + $0x8] sm:$0xf]
        %v511 = vld [vmem:[%s507 + $0xc] sm:$0xf]
        %v512 = vld [vmem:[%s507 + $0x10] sm:$0xf]
        %v513 = vld [vmem:[%s507 + $0x14] sm:$0xf]
        %v514 = vld [vmem:[%s507 + $0x18] sm:$0xf]
        %v515 = vld [vmem:[%s507 + $0x1c] sm:$0xf]
        %v516 = vld [vmem:[%s507 + $0x20] sm:$0xf]
        %v517 = vld [vmem:[%s507 + $0x24] sm:$0xf]
        %v518 = vld [vmem:[%s507 + $0x28] sm:$0xf]
        %v519 = vld [vmem:[%s507 + $0x2c] sm:$0xf]
        %v520 = vld [vmem:[%s507 + $0x30] sm:$0xf]
        %v521 = vld [vmem:[%s507 + $0x34] sm:$0xf]
        %v522 = vld [vmem:[%s507 + $0x38] sm:$0xf]
        %v523 = vld [vmem:[%s507 + $0x3c] sm:$0xf]
        %v524 = vperm.slane %v505, 0
        %v541 = vunpack.c.l.b16 %v508
        %v542 = vunpack.c.l.b16 %v509
        %v543 = vunpack.c.l.b16 %v510
        %v544 = vunpack.c.l.b16 %v511
        %v545 = vunpack.c.l.b16 %v512
        %v546 = vunpack.c.l.b16 %v513
        %v547 = vunpack.c.l.b16 %v514
        %v548 = vunpack.c.l.b16 %v515
        %v549 = vunpack.c.l.b16 %v516
        %v550 = vunpack.c.l.b16 %v517
        %v551 = vunpack.c.l.b16 %v518
        %v552 = vunpack.c.l.b16 %v519
        %v553 = vunpack.c.l.b16 %v520
        %v554 = vunpack.c.l.b16 %v521
        %v555 = vunpack.c.l.b16 %v522
        %v556 = vunpack.c.l.b16 %v523
        %v557 = vpack.c.b16 %v542, %v541
        %v558 = vpack.c.b16 %v544, %v543
        %v559 = vpack.c.b16 %v546, %v545
        %v560 = vpack.c.b16 %v548, %v547
        %v561 = vpack.c.b16 %v550, %v549
        %v562 = vpack.c.b16 %v552, %v551
        %v563 = vpack.c.b16 %v554, %v553
        %v564 = vpack.c.b16 %v556, %v555
        %573 = vmatpush.bf16.msra.mxu0 %v564
        %574 = vmatpush.bf16.msra.mxu0 %v563
        %575 = vmatpush.bf16.msra.mxu0 %v562
        %576 = vmatpush.bf16.msra.mxu0 %v561
        %577 = vmatpush.bf16.msra.mxu0 %v560
        %578 = vmatpush.bf16.msra.mxu0 %v559
        %579 = vmatpush.bf16.msra.mxu0 %v558
        %580 = vmatpush.bf16.msra.mxu0 %v557
        %581 = vmatmul.bf16.gmra.mxu0 %v506
        %v582 = vpop.f32.mrf.mxu0
        %v583 = vadd.f32 %v524, %v582
        %v584 = vpop.f32.mrf.mxu0
        %v585 = vadd.f32 %v524, %v584
        %586 = vdwg.mxu0
        %v587 = vmax.f32 %v583, 0.0
        %v588 = vmax.f32 %v585, 0.0
        %v589 = vperm.slane %v505, 1
        %v590 = vmul.f32 %v587, %v589
        %v591 = vmul.f32 %v588, %v589
        %v592 = vperm.slane %v505, 2
        %v593 = vadd.f32 %v590, %v592
        %v594 = vadd.f32 %v591, %v592
        %595 = vst [vmem:[%s223] sm:$0xff] %v593
        %596 = vst [vmem:[%s223 + $0x8] sm:$0xff] %v594
        %s597 = sand.u32 %s97, 1
        %s598 = scalar_lea.sflag [#allocation4], %s597
        %s599 = sand.u32 %s97, 1
        %s600 = smul.addr %s599, 16
        %s601 = scalar_lea.vmem [#allocation8], %s600
        // Predicated region
        $region45: #{tpu_custom_call.1} parent=31 // pred_check
          %p602 = pneg %p107
        $region46: #{tpu_custom_call.1} parent=31 // pred_check_branch
          %604 = sbr.rel (%p602) target = $region48
        $region47: #{tpu_custom_call.1} parent=31 // pred_region
          %s605 = smul.u32 2, %s21
          %607 = vsyncadd %s598, 0
          %s608 = smul.addr %s605, 8
          %s609 = scalar_lea.hbm %s3, %s608
          %s610 = sshll.u32 %s601, 4
          %s611 = int_to_ptr.vmem [resolvable:$true] %s610
          %s612 = sshll.u32 %s609, 4
          %s613 = int_to_ptr.hbm [resolvable:$true] %s612
          %618 = dma.vmem_to_hbm [thread:$0]  %s611, 256, %s613, %s598, 128, 128, 8
        $region48: #{tpu_custom_call.1} parent=31 // pred_fallthru
          _
      $region32: #{tpu_custom_call.1} parent=5 // pred_fallthru
        _
      %p619 = scmp.le.s32.totalorder 2, %s16
      // Predicated region
      $region49: #{tpu_custom_call.1} parent=5 // pred_check
        %p620 = pneg %p619
      $region50: #{tpu_custom_call.1} parent=5 // pred_check_branch
        %622 = sbr.rel (%p620) target = $region52
      $region51: #{tpu_custom_call.1} parent=5 // pred_region
        %s623 = ssub.s32 %s16, 2
        // Predicated region
        $region53: #{tpu_custom_call.1} parent=51 // pred_check
          %p624 = pneg %p113
        $region54: #{tpu_custom_call.1} parent=51 // pred_check_branch
          %626 = sbr.rel (%p624) target = $region56
        $region55: #{tpu_custom_call.1} parent=51 // pred_region
          %s627 = sand.u32 %s98, 1
          %s628 = scalar_lea.sflag [#allocation4], %s627
          %s629 = sand.u32 %s98, 1
          %s630 = smul.addr %s629, 16
          %s631 = scalar_lea.vmem [#allocation8], %s630
          %633 = dma.done %s628, 256
        $region56: #{tpu_custom_call.1} parent=51 // pred_fallthru
          _
      $region52: #{tpu_custom_call.1} parent=5 // pred_fallthru
        _
    $region6: #{tpu_custom_call.1} parent=1 // loop_footer
      %s20 = sadd.s32 1, %s16
    $region7: #{tpu_custom_call.1} parent=1 // loop_footer_branch
      %15 = sbr.rel target = $region3
    $region8: #{tpu_custom_call.1} parent=1 // loop_exit
      _
    %634 = vsyncpa [#allocation3], 1
    %s635 = scalar_lea.sflag [#allocation3], 1
    %636 = vsyncpa %s635, 1
    %637 = vsyncpa [#allocation6], 1
    %638 = vsyncpa [#allocation4], 1
    %s639 = scalar_lea.sflag [#allocation4], 1
    %640 = vsyncpa %s639, 1

</llo_original>
